<compile_context>
chip_gen: v5e
topology: v5e:2x2
jax: 0.10.0
libtpu: 0.0.40
codegen_flags: <defaults>
</compile_context>

<pallas_src>
import math

import numpy as np
import jax
import jax.numpy as jnp
from jax.experimental import pallas as pl
from jax.experimental.pallas import tpu as pltpu


def _round_up(x: int, m: int) -> int:
    return ((x + m - 1) // m) * m


def _pick_tile(n_pad: int, target: int) -> int:
    """Largest multiple of 128 that divides n_pad and is <= target (>= 128)."""
    best = 128
    t = 128
    while t <= min(target, n_pad):
        if n_pad % t == 0:
            best = t
        t += 128
    return best


def _vmem_capacity_bytes() -> int:
    try:
        return int(pltpu.get_tpu_info().vmem_capacity_bytes)
    except Exception:
        return 64 * 1024 * 1024  # conservative: v7x per-TensorCore VMEM


# ---------------------------------------------------------------------------
# Fused kernel: out[i, :] = sum_k adj[i, k] @ (x[k, :] @ W) + bias
# Grid = (row tile, K tile), K innermost.  The out block index is (i, 0) for
# every K step, so the out tile stays VMEM-resident and is accumulated into
# directly (initialized with bias at k == 0).
# ---------------------------------------------------------------------------
def _gcn_fused_kernel(adj_ref, x_ref, w_ref, b_ref, out_ref):
    k = pl.program_id(1)

    @pl.when(k == 0)
    def _():
        out_ref[...] = jnp.broadcast_to(b_ref[...], out_ref.shape)

    # Recompute the support block for this K tile (cheap: F_in-wide) and feed
    # it to the MXU in the streaming dtype so the big matmul stays bf16.
    # TODO(synk): if this ever becomes MXU-bound and f_in < f_out, algebraically
    # reorder to (adj @ x) @ W so the N x N contraction produces width f_in.
    s = jnp.dot(x_ref[...], w_ref[...], preferred_element_type=jnp.float32)
    out_ref[...] += jnp.dot(
        adj_ref[...], s.astype(adj_ref.dtype), preferred_element_type=jnp.float32
    )


def graph_convolution(x, adj, weight, bias=None, *, tile_m=512, tile_k=512,
                      compute_dtype=jnp.bfloat16):
    """GCN layer: adj @ (x @ weight) + bias.

    x:      [N, F_in]   float32
    adj:    [N, N]      float32 (dense adjacency; torch.spmm semantics == dense matmul)
    weight: [F_in, F_out]
    bias:   [F_out] or None
    """
    n, f_in = x.shape
    f_out = weight.shape[1]
    assert adj.shape == (n, n)

    # Pad N only to a multiple of 128 (lane/K alignment), not to the tile size;
    # tiles are then chosen as divisors of the padded N.  F_out is padded to a
    # multiple of 128 for a lane-dense (unmasked-vst) output.
    n_pad = _round_up(n, 128)
    f_out_pad = _round_up(f_out, 128)

    tile_k = _pick_tile(n_pad, tile_k)
    tile_m = _pick_tile(n_pad, tile_m)
    # v7x has two TensorCores per chip: keep >= 2 row tiles when possible so the
    # "parallel" row axis can be sharded across cores.
    if n_pad // tile_m < 2 and n_pad >= 256:
        tile_m = _pick_tile(n_pad, n_pad // 2)

    cdt = jnp.dtype(compute_dtype)
    f32 = jnp.float32

    # Cast the MXU streams to the compute dtype; only materialize padded copies
    # when the shapes are actually unaligned.
    adj_c = adj.astype(compute_dtype)
    x_c = x.astype(compute_dtype)
    if n_pad != n:
        adj_c = jnp.pad(adj_c, ((0, n_pad - n), (0, n_pad - n)))
        x_c = jnp.pad(x_c, ((0, n_pad - n), (0, 0)))

    w_c = weight.astype(compute_dtype)
    if f_out_pad != f_out:
        w_c = jnp.pad(w_c, ((0, 0), (0, f_out_pad - f_out)))

    if bias is None:
        b_c = jnp.zeros((1, f_out_pad), f32)
    else:
        b_c = bias.astype(f32).reshape(1, f_out)
        if f_out_pad != f_out:
            b_c = jnp.pad(b_c, ((0, 0), (0, f_out_pad - f_out)))

    m_tiles = n_pad // tile_m
    k_tiles = n_pad // tile_k

    # VMEM budget (double-buffered blocks), capped against physical VMEM.
    vmem_bytes = (
        2 * tile_m * tile_k * cdt.itemsize       # adj tile
        + 2 * tile_k * f_in * cdt.itemsize       # x tile
        + 2 * f_in * f_out_pad * cdt.itemsize    # weight (constant block)
        + 2 * f_out_pad * 4                      # bias (constant block)
        + 2 * tile_m * f_out_pad * 4             # out tile (f32)
    )
    vmem_cap = _vmem_capacity_bytes()
    vmem_limit = min(max(4 * vmem_bytes, 16 * 1024 * 1024),
                     vmem_cap - 16 * 1024 * 1024)
    vmem_limit = int(max(vmem_limit, 2 * vmem_bytes))

    out_p = pl.pallas_call(
        _gcn_fused_kernel,
        out_shape=jax.ShapeDtypeStruct((n_pad, f_out_pad), f32),
        grid_spec=pltpu.PrefetchScalarGridSpec(
            num_scalar_prefetch=0,
            grid=(m_tiles, k_tiles),                                 # K innermost
            in_specs=[
                pl.BlockSpec((tile_m, tile_k), lambda i, k: (i, k)),   # adj
                pl.BlockSpec((tile_k, f_in), lambda i, k: (k, 0)),     # x
                # TODO(synk): pipeline_mode=pl.Buffered(1) on the two constant-index
                # blocks below would save <48 KiB of VMEM; left at the default.
                pl.BlockSpec((f_in, f_out_pad), lambda i, k: (0, 0)),  # weight
                pl.BlockSpec((1, f_out_pad), lambda i, k: (0, 0)),     # bias
            ],
            out_specs=pl.BlockSpec((tile_m, f_out_pad), lambda i, k: (i, 0)),
        ),
        compiler_params=pltpu.CompilerParams(
            dimension_semantics=("parallel", "arbitrary"),
            vmem_limit_bytes=vmem_limit,
        ),
    )(adj_c, x_c, w_c, b_c)

    return out_p[:n, :f_out]


if __name__ == "__main__":
    # Small shapes consistent with the module: N nodes, in_features -> out_features.
    N, F_IN, F_OUT = 128, 64, 32

    key = jax.random.PRNGKey(0)
    k_x, k_adj, k_w, k_b = jax.random.split(key, 4)

    # reset_parameters(): uniform(-stdv, stdv) with stdv = 1/sqrt(out_features).
    stdv = 1.0 / math.sqrt(F_OUT)
    weight = jax.random.uniform(k_w, (F_IN, F_OUT), jnp.float32, -stdv, stdv)
    bias = jax.random.uniform(k_b, (F_OUT,), jnp.float32, -stdv, stdv)

    # Node features and a dense row-normalized random adjacency with self-loops.
    x = jax.random.normal(k_x, (N, F_IN), jnp.float32)
    adj_raw = (jax.random.uniform(k_adj, (N, N)) < 0.1).astype(jnp.float32)
    adj_raw = adj_raw + jnp.eye(N, dtype=jnp.float32)
    adj = adj_raw / jnp.sum(adj_raw, axis=1, keepdims=True)

    out = graph_convolution(x, adj, weight, bias)
    out = jax.block_until_ready(out)

    # Exact float64 reference (numpy).  Tolerance is sized for the bf16 input
    # streams (adj/x/W rounded to bf16; accumulation stays f32).
    x64 = np.asarray(x, dtype=np.float64)
    a64 = np.asarray(adj, dtype=np.float64)
    w64 = np.asarray(weight, dtype=np.float64)
    b64 = np.asarray(bias, dtype=np.float64)
    ref = a64 @ (x64 @ w64) + b64

    assert out.shape == (N, F_OUT)
    err = float(np.max(np.abs(np.asarray(out, dtype=np.float64) - ref)))
    assert err < 3e-2, f"mismatch vs reference: max abs err {err}"

    print("KERNEL_OK")
</pallas_src>

<mosaic_0001>
module attributes {stable_mosaic.version = 11 : i64} {
  func.func @_gcn_fused_kernel(%arg0: i32, %arg1: i32, %arg2: memref<128x128xbf16, #tpu.memory_space<vmem>>, %arg3: memref<128x64xbf16, #tpu.memory_space<vmem>>, %arg4: memref<64x128xbf16, #tpu.memory_space<vmem>>, %arg5: memref<1x128xf32, #tpu.memory_space<vmem>>, %arg6: memref<128x128xf32, #tpu.memory_space<vmem>>) attributes {dimension_semantics = [#tpu.dimension_semantics<parallel>, #tpu.dimension_semantics<arbitrary>], iteration_bounds = array<i64: 1, 1>, scalar_prefetch = 0 : i64, scratch_operands = 0 : i64, tpu.core_type = #tpu.core_type<tc>, window_params = [{transform_indices = @transform_0, window_bounds = array<i64: 128, 128>}, {transform_indices = @transform_1, window_bounds = array<i64: 128, 64>}, {pipeline_mode = #tpu.pipeline_mode<synchronous>, transform_indices = @transform_2, window_bounds = array<i64: 64, 128>}, {pipeline_mode = #tpu.pipeline_mode<synchronous>, transform_indices = @transform_3, window_bounds = array<i64: 1, 128>}, {transform_indices = @transform_4, window_bounds = array<i64: 128, 128>}]} {
    %c0_i32 = arith.constant 0 : i32
    %0 = arith.cmpi eq, %arg1, %c0_i32 : i32
    %1 = arith.extui %0 : i1 to i32
    %c0_i32_0 = arith.constant 0 : i32
    %2 = arith.cmpi ne, %1, %c0_i32_0 : i32
    scf.if %2 {
      %c0_11 = arith.constant 0 : index
      %c0_12 = arith.constant 0 : index
      %12 = vector.load %arg5[%c0_11, %c0_12] : memref<1x128xf32, #tpu.memory_space<vmem>>, vector<1x128xf32>
      %13 = vector.shape_cast %12 : vector<1x128xf32> to vector<1x128xf32>
      %14 = vector.broadcast %13 : vector<1x128xf32> to vector<128x128xf32>
      %c0_13 = arith.constant 0 : index
      %c0_14 = arith.constant 0 : index
      %15 = vector.load %arg6[%c0_13, %c0_14] : memref<128x128xf32, #tpu.memory_space<vmem>>, vector<128x128xf32>
      tpu.vector_store %arg6[%c0_13, %c0_14], %14 {strides = array<i32>} : memref<128x128xf32, #tpu.memory_space<vmem>>, vector<128x128xf32>,
    } else {
    }
    %c0 = arith.constant 0 : index
    %c0_1 = arith.constant 0 : index
    %3 = vector.load %arg3[%c0, %c0_1] : memref<128x64xbf16, #tpu.memory_space<vmem>>, vector<128x64xbf16>
    %c0_2 = arith.constant 0 : index
    %c0_3 = arith.constant 0 : index
    %4 = vector.load %arg4[%c0_2, %c0_3] : memref<64x128xbf16, #tpu.memory_space<vmem>>, vector<64x128xbf16>
    %cst = arith.constant dense<0.000000e+00> : vector<128x128xf32>
    %5 = tpu.matmul %3, %4, %cst {dimension_numbers = #tpu.dot_dimension_numbers<[1], [0], [0], [1], [0, 0, 1, 1], [], []>} : vector<128x64xbf16>, vector<64x128xbf16>, vector<128x128xf32> -> vector<128x128xf32>
    %c0_4 = arith.constant 0 : index
    %c0_5 = arith.constant 0 : index
    %6 = vector.load %arg6[%c0_4, %c0_5] : memref<128x128xf32, #tpu.memory_space<vmem>>, vector<128x128xf32>
    %c0_6 = arith.constant 0 : index
    %c0_7 = arith.constant 0 : index
    %7 = vector.load %arg2[%c0_6, %c0_7] : memref<128x128xbf16, #tpu.memory_space<vmem>>, vector<128x128xbf16>
    %8 = arith.truncf %5 : vector<128x128xf32> to vector<128x128xbf16>
    %cst_8 = arith.constant dense<0.000000e+00> : vector<128x128xf32>
    %9 = tpu.matmul %7, %8, %cst_8 {dimension_numbers = #tpu.dot_dimension_numbers<[1], [0], [0], [1], [0, 0, 1, 1], [], []>} : vector<128x128xbf16>, vector<128x128xbf16>, vector<128x128xf32> -> vector<128x128xf32>
    %10 = arith.addf %6, %9 : vector<128x128xf32>
    %c0_9 = arith.constant 0 : index
    %c0_10 = arith.constant 0 : index
    %11 = vector.load %arg6[%c0_9, %c0_10] : memref<128x128xf32, #tpu.memory_space<vmem>>, vector<128x128xf32>
    tpu.vector_store %arg6[%c0_9, %c0_10], %10 {strides = array<i32>} : memref<128x128xf32, #tpu.memory_space<vmem>>, vector<128x128xf32>,
    return
  }
  func.func @transform_0(%arg0: i32, %arg1: i32) -> (i32, i32) {
    %c0_i32 = arith.constant 0 : i32
    return %arg0, %arg1 : i32, i32
  }
  func.func @transform_1(%arg0: i32, %arg1: i32) -> (i32, i32) {
    %c0_i32 = arith.constant 0 : i32
    %c0_i32_0 = arith.constant 0 : i32
    return %arg1, %c0_i32 : i32, i32
  }
  func.func @transform_2(%arg0: i32, %arg1: i32) -> (i32, i32) {
    %c0_i32 = arith.constant 0 : i32
    %c0_i32_0 = arith.constant 0 : i32
    %c0_i32_1 = arith.constant 0 : i32
    return %c0_i32, %c0_i32_0 : i32, i32
  }
  func.func @transform_3(%arg0: i32, %arg1: i32) -> (i32, i32) {
    %c0_i32 = arith.constant 0 : i32
    %c0_i32_0 = arith.constant 0 : i32
    %c0_i32_1 = arith.constant 0 : i32
    return %c0_i32, %c0_i32_0 : i32, i32
  }
  func.func @transform_4(%arg0: i32, %arg1: i32) -> (i32, i32) {
    %c0_i32 = arith.constant 0 : i32
    %c0_i32_0 = arith.constant 0 : i32
    return %arg0, %c0_i32 : i32, i32
  }
}

</mosaic_0001>

<llo_original>
// kernel: tpu_custom_call.1
$region0: #{tpu_custom_call.1}
  #allocation0 [shape = 'u32[]', space=smem, size = 0x4, offset = 0x4, fixed_abs, tag = 'smem constant byte address 0x4 - core index']
  #allocation1 [shape = 'u32[72,128]{1,0:T(1,128)}', space=vmem, size = 0x9000, scoped, tag = 'internal scratch']
  %s0 = inlined_call_operand.vmem [shape: bf16[128,128], index: 0, kind: input, shape index: {}]
  %s1 = inlined_call_operand.vmem [shape: bf16[128,64], index: 1, kind: input, shape index: {}]
  %s2 = inlined_call_operand.vmem [shape: bf16[64,128], index: 2, kind: input, shape index: {}]
  %s3 = inlined_call_operand.vmem [shape: f32[1,128], index: 3, kind: input, shape index: {}]
  %s4 = inlined_call_operand.hbm [shape: f32[128,128], index: 4, kind: output, shape index: {}]
  %s5 = sld [smem:[#allocation0]]
  $region30: #{tpu_custom_call.1} parent=0
    _
  %s7 = ssub.s32 1, %s5
  %s8 = scalar_select 0, %s7, %s5
  $region1: #{tpu_custom_call.1} parent=0
    #allocation2 [shape = 'u8[65536]{0}', space=vmem, size = 0x10000, scoped, tag = 'output window, operand 0, single buffered']
    #allocation3 [shape = 's32[1]{0}', space=sflag, size = 0x4, scoped, tag = 'scoped memory for tpu_custom_call.1']
    %9 = vsyncpa [#allocation3], 0
    // Predicated region
    $region2: #{tpu_custom_call.1} parent=1 // pred_check
      _
    $region3: #{tpu_custom_call.1} parent=1 // pred_check_branch
      %11 = sbr.rel (0) target = $region5
    $region4: #{tpu_custom_call.1} parent=1 // pred_region
      _
    $region5: #{tpu_custom_call.1} parent=1 // pred_fallthru
      _
    // Predicated region
    $region6: #{tpu_custom_call.1} parent=1 // pred_check
      _
    $region7: #{tpu_custom_call.1} parent=1 // pred_check_branch
      %13 = sbr.rel (0) target = $region9
    $region8: #{tpu_custom_call.1} parent=1 // pred_region
      _
    $region9: #{tpu_custom_call.1} parent=1 // pred_fallthru
      _
    // Predicated region
    $region10: #{tpu_custom_call.1} parent=1 // pred_check
      _
    $region11: #{tpu_custom_call.1} parent=1 // pred_check_branch
      %15 = sbr.rel (0) target = $region13
    $region12: #{tpu_custom_call.1} parent=1 // pred_region
      _
    $region13: #{tpu_custom_call.1} parent=1 // pred_fallthru
      _
    // Predicated region
    $region14: #{tpu_custom_call.1} parent=1 // pred_check
      _
    $region15: #{tpu_custom_call.1} parent=1 // pred_check_branch
      %17 = sbr.rel (0) target = $region17
    $region16: #{tpu_custom_call.1} parent=1 // pred_region
      _
    $region17: #{tpu_custom_call.1} parent=1 // pred_fallthru
      _
    %p19 = scmp.eq.s32.totalorder 0, 0
    // Predicated region
    $region18: #{tpu_custom_call.1} parent=1 // pred_check
      %p20 = pneg %p19
    $region19: #{tpu_custom_call.1} parent=1 // pred_check_branch
      %22 = sbr.rel (%p20) target = $region21
    $region20: #{tpu_custom_call.1} parent=1 // pred_region
      %v23 = vld [vmem:[%s3] sm:$0x1]
      %v25 = vperm.slane %v23, 0
      %27 = vst [vmem:[#allocation2] sm:$0xff] %v25
      %28 = vst [vmem:[#allocation2 + $0x8] sm:$0xff] %v25
      %29 = vst [vmem:[#allocation2 + $0x10] sm:$0xff] %v25
      %30 = vst [vmem:[#allocation2 + $0x18] sm:$0xff] %v25
      %31 = vst [vmem:[#allocation2 + $0x20] sm:$0xff] %v25
      %32 = vst [vmem:[#allocation2 + $0x28] sm:$0xff] %v25
      %33 = vst [vmem:[#allocation2 + $0x30] sm:$0xff] %v25
      %34 = vst [vmem:[#allocation2 + $0x38] sm:$0xff] %v25
      %35 = vst [vmem:[#allocation2 + $0x40] sm:$0xff] %v25
      %36 = vst [vmem:[#allocation2 + $0x48] sm:$0xff] %v25
      %37 = vst [vmem:[#allocation2 + $0x50] sm:$0xff] %v25
      %38 = vst [vmem:[#allocation2 + $0x58] sm:$0xff] %v25
      %39 = vst [vmem:[#allocation2 + $0x60] sm:$0xff] %v25
      %40 = vst [vmem:[#allocation2 + $0x68] sm:$0xff] %v25
      %41 = vst [vmem:[#allocation2 + $0x70] sm:$0xff] %v25
      %42 = vst [vmem:[#allocation2 + $0x78] sm:$0xff] %v25
    $region21: #{tpu_custom_call.1} parent=1 // pred_fallthru
      _
    %v43 = vld [vmem:[%s1] sm:$0xf]
    %v44 = vld [vmem:[%s1 + $0x4] sm:$0xf]
    %v45 = vld [vmem:[%s1 + $0x8] sm:$0xf]
    %v46 = vld [vmem:[%s1 + $0xc] sm:$0xf]
    %v47 = vld [vmem:[%s1 + $0x10] sm:$0xf]
    %v48 = vld [vmem:[%s1 + $0x14] sm:$0xf]
    %v49 = vld [vmem:[%s1 + $0x18] sm:$0xf]
    %v50 = vld [vmem:[%s1 + $0x1c] sm:$0xf]
    %v51 = vld [vmem:[%s1 + $0x20] sm:$0xf]
    %v52 = vld [vmem:[%s1 + $0x24] sm:$0xf]
    %v53 = vld [vmem:[%s1 + $0x28] sm:$0xf]
    %v54 = vld [vmem:[%s1 + $0x2c] sm:$0xf]
    %v55 = vld [vmem:[%s1 + $0x30] sm:$0xf]
    %v56 = vld [vmem:[%s1 + $0x34] sm:$0xf]
    %v57 = vld [vmem:[%s1 + $0x38] sm:$0xf]
    %v58 = vld [vmem:[%s1 + $0x3c] sm:$0xf]
    %v59 = vld [vmem:[%s2] sm:$0xf]
    %v60 = vld [vmem:[%s2 + $0x4] sm:$0xf]
    %v61 = vld [vmem:[%s2 + $0x8] sm:$0xf]
    %v62 = vld [vmem:[%s2 + $0xc] sm:$0xf]
    %v63 = vld [vmem:[%s2 + $0x10] sm:$0xf]
    %v64 = vld [vmem:[%s2 + $0x14] sm:$0xf]
    %v65 = vld [vmem:[%s2 + $0x18] sm:$0xf]
    %v66 = vld [vmem:[%s2 + $0x1c] sm:$0xf]
    %v83 = vunpack.c.l.b16 %v43
    %v84 = vunpack.c.l.b16 %v44
    %v85 = vunpack.c.l.b16 %v45
    %v86 = vunpack.c.l.b16 %v46
    %v87 = vunpack.c.l.b16 %v47
    %v88 = vunpack.c.l.b16 %v48
    %v89 = vunpack.c.l.b16 %v49
    %v90 = vunpack.c.l.b16 %v50
    %v91 = vunpack.c.l.b16 %v51
    %v92 = vunpack.c.l.b16 %v52
    %v93 = vunpack.c.l.b16 %v53
    %v94 = vunpack.c.l.b16 %v54
    %v95 = vunpack.c.l.b16 %v55
    %v96 = vunpack.c.l.b16 %v56
    %v97 = vunpack.c.l.b16 %v57
    %v98 = vunpack.c.l.b16 %v58
    %v99 = vpack.c.b16 %v84, %v83
    %v100 = vpack.c.b16 %v86, %v85
    %v101 = vpack.c.b16 %v88, %v87
    %v102 = vpack.c.b16 %v90, %v89
    %v103 = vpack.c.b16 %v92, %v91
    %v104 = vpack.c.b16 %v94, %v93
    %v105 = vpack.c.b16 %v96, %v95
    %v106 = vpack.c.b16 %v98, %v97
    %v115 = vunpack.c.l.b16 %v59
    %v116 = vunpack.c.l.b16 %v60
    %v117 = vunpack.c.l.b16 %v61
    %v118 = vunpack.c.l.b16 %v62
    %v119 = vunpack.c.l.b16 %v63
    %v120 = vunpack.c.l.b16 %v64
    %v121 = vunpack.c.l.b16 %v65
    %v122 = vunpack.c.l.b16 %v66
    %v123 = vpack.c.b16 %v116, %v115
    %v124 = vpack.c.b16 %v118, %v117
    %v125 = vpack.c.b16 %v120, %v119
    %v126 = vpack.c.b16 %v122, %v121
    %vm131 = vcmask 523264
    %v133 = vsel %vm131, %v99, 0
    %v136 = vsel %vm131, %v100, 0
    %v139 = vsel %vm131, %v101, 0
    %v142 = vsel %vm131, %v102, 0
    %v145 = vsel %vm131, %v103, 0
    %v148 = vsel %vm131, %v104, 0
    %v151 = vsel %vm131, %v105, 0
    %v154 = vsel %vm131, %v106, 0
    %156 = vmatpush.bf16.msra.mxu0 0
    %157 = vmatpush.bf16.msra.mxu0 0
    %158 = vmatpush.bf16.msra.mxu0 0
    %159 = vmatpush.bf16.msra.mxu0 0
    %160 = vmatpush.bf16.msra.mxu0 %v126
    %161 = vmatpush.bf16.msra.mxu0 %v125
    %162 = vmatpush.bf16.msra.mxu0 %v124
    %163 = vmatpush.bf16.msra.mxu0 %v123
    %164 = vmatmul.bf16.gmra.mxu0 %v133
    %v165 = vpop.f32.mrf.mxu0
    %v166 = vadd.f32 0.0, %v165
    %v167 = vpop.f32.mrf.mxu0
    %v168 = vadd.f32 0.0, %v167
    %169 = vmatmul.bf16.gmra.mxu0 %v136
    %v170 = vpop.f32.mrf.mxu0
    %v171 = vadd.f32 0.0, %v170
    %v172 = vpop.f32.mrf.mxu0
    %v173 = vadd.f32 0.0, %v172
    %174 = vmatmul.bf16.gmra.mxu0 %v139
    %v175 = vpop.f32.mrf.mxu0
    %v176 = vadd.f32 0.0, %v175
    %v177 = vpop.f32.mrf.mxu0
    %v178 = vadd.f32 0.0, %v177
    %179 = vmatmul.bf16.gmra.mxu0 %v142
    %v180 = vpop.f32.mrf.mxu0
    %v181 = vadd.f32 0.0, %v180
    %v182 = vpop.f32.mrf.mxu0
    %v183 = vadd.f32 0.0, %v182
    %184 = vmatmul.bf16.gmra.mxu0 %v145
    %v185 = vpop.f32.mrf.mxu0
    %v186 = vadd.f32 0.0, %v185
    %v187 = vpop.f32.mrf.mxu0
    %v188 = vadd.f32 0.0, %v187
    %189 = vmatmul.bf16.gmra.mxu0 %v148
    %v190 = vpop.f32.mrf.mxu0
    %v191 = vadd.f32 0.0, %v190
    %v192 = vpop.f32.mrf.mxu0
    %v193 = vadd.f32 0.0, %v192
    %194 = vmatmul.bf16.gmra.mxu0 %v151
    %v195 = vpop.f32.mrf.mxu0
    %v196 = vadd.f32 0.0, %v195
    %v197 = vpop.f32.mrf.mxu0
    %v198 = vadd.f32 0.0, %v197
    %199 = vmatmul.bf16.gmra.mxu0 %v154
    %v200 = vpop.f32.mrf.mxu0
    %v201 = vadd.f32 0.0, %v200
    %v202 = vpop.f32.mrf.mxu0
    %v203 = vadd.f32 0.0, %v202
    %204 = vdwg.mxu0
    %v205 = vld [vmem:[#allocation2] sm:$0xff]
    %v206 = vld [vmem:[#allocation2 + $0x8] sm:$0xff]
    %v207 = vld [vmem:[#allocation2 + $0x10] sm:$0xff]
    %v208 = vld [vmem:[#allocation2 + $0x18] sm:$0xff]
    %v209 = vld [vmem:[#allocation2 + $0x20] sm:$0xff]
    %v210 = vld [vmem:[#allocation2 + $0x28] sm:$0xff]
    %v211 = vld [vmem:[#allocation2 + $0x30] sm:$0xff]
    %v212 = vld [vmem:[#allocation2 + $0x38] sm:$0xff]
    %v213 = vld [vmem:[#allocation2 + $0x40] sm:$0xff]
    %v214 = vld [vmem:[#allocation2 + $0x48] sm:$0xff]
    %v215 = vld [vmem:[#allocation2 + $0x50] sm:$0xff]
    %v216 = vld [vmem:[#allocation2 + $0x58] sm:$0xff]
    %v217 = vld [vmem:[#allocation2 + $0x60] sm:$0xff]
    %v218 = vld [vmem:[#allocation2 + $0x68] sm:$0xff]
    %v219 = vld [vmem:[#allocation2 + $0x70] sm:$0xff]
    %v220 = vld [vmem:[#allocation2 + $0x78] sm:$0xff]
    %v221 = vld [vmem:[%s0] sm:$0xf]
    %v222 = vld [vmem:[%s0 + $0x4] sm:$0xf]
    %v223 = vld [vmem:[%s0 + $0x8] sm:$0xf]
    %v224 = vld [vmem:[%s0 + $0xc] sm:$0xf]
    %v225 = vld [vmem:[%s0 + $0x10] sm:$0xf]
    %v226 = vld [vmem:[%s0 + $0x14] sm:$0xf]
    %v227 = vld [vmem:[%s0 + $0x18] sm:$0xf]
    %v228 = vld [vmem:[%s0 + $0x1c] sm:$0xf]
    %v229 = vld [vmem:[%s0 + $0x20] sm:$0xf]
    %v230 = vld [vmem:[%s0 + $0x24] sm:$0xf]
    %v231 = vld [vmem:[%s0 + $0x28] sm:$0xf]
    %v232 = vld [vmem:[%s0 + $0x2c] sm:$0xf]
    %v233 = vld [vmem:[%s0 + $0x30] sm:$0xf]
    %v234 = vld [vmem:[%s0 + $0x34] sm:$0xf]
    %v235 = vld [vmem:[%s0 + $0x38] sm:$0xf]
    %v236 = vld [vmem:[%s0 + $0x3c] sm:$0xf]
    %v237 = vpack.c.bf16 %v168, %v166
    %v238 = vpack.c.bf16 %v173, %v171
    %v239 = vpack.c.bf16 %v178, %v176
    %v240 = vpack.c.bf16 %v183, %v181
    %v241 = vpack.c.bf16 %v188, %v186
    %v242 = vpack.c.bf16 %v193, %v191
    %v243 = vpack.c.bf16 %v198, %v196
    %v244 = vpack.c.bf16 %v203, %v201
    %v261 = vunpack.c.l.b16 %v221
    %v262 = vunpack.c.l.b16 %v222
    %v263 = vunpack.c.l.b16 %v223
    %v264 = vunpack.c.l.b16 %v224
    %v265 = vunpack.c.l.b16 %v225
    %v266 = vunpack.c.l.b16 %v226
    %v267 = vunpack.c.l.b16 %v227
    %v268 = vunpack.c.l.b16 %v228
    %v269 = vunpack.c.l.b16 %v229
    %v270 = vunpack.c.l.b16 %v230
    %v271 = vunpack.c.l.b16 %v231
    %v272 = vunpack.c.l.b16 %v232
    %v273 = vunpack.c.l.b16 %v233
    %v274 = vunpack.c.l.b16 %v234
    %v275 = vunpack.c.l.b16 %v235
    %v276 = vunpack.c.l.b16 %v236
    %v277 = vpack.c.b16 %v262, %v261
    %v278 = vpack.c.b16 %v264, %v263
    %v279 = vpack.c.b16 %v266, %v265
    %v280 = vpack.c.b16 %v268, %v267
    %v281 = vpack.c.b16 %v270, %v269
    %v282 = vpack.c.b16 %v272, %v271
    %v283 = vpack.c.b16 %v274, %v273
    %v284 = vpack.c.b16 %v276, %v275
    %293 = vmatpush.bf16.msra.mxu0 %v244
    %294 = vmatpush.bf16.msra.mxu0 %v243
    %295 = vmatpush.bf16.msra.mxu0 %v242
    %296 = vmatpush.bf16.msra.mxu0 %v241
    %297 = vmatpush.bf16.msra.mxu0 %v240
    %298 = vmatpush.bf16.msra.mxu0 %v239
    %299 = vmatpush.bf16.msra.mxu0 %v238
    %300 = vmatpush.bf16.msra.mxu0 %v237
    %301 = vmatmul.bf16.gmra.mxu0 %v277
    %v302 = vpop.f32.mrf.mxu0
    %v303 = vadd.f32 0.0, %v302
    %v304 = vpop.f32.mrf.mxu0
    %v305 = vadd.f32 0.0, %v304
    %306 = vmatmul.bf16.gmra.mxu0 %v278
    %v307 = vpop.f32.mrf.mxu0
    %v308 = vadd.f32 0.0, %v307
    %v309 = vpop.f32.mrf.mxu0
    %v310 = vadd.f32 0.0, %v309
    %311 = vmatmul.bf16.gmra.mxu0 %v279
    %v312 = vpop.f32.mrf.mxu0
    %v313 = vadd.f32 0.0, %v312
    %v314 = vpop.f32.mrf.mxu0
    %v315 = vadd.f32 0.0, %v314
    %316 = vmatmul.bf16.gmra.mxu0 %v280
    %v317 = vpop.f32.mrf.mxu0
    %v318 = vadd.f32 0.0, %v317
    %v319 = vpop.f32.mrf.mxu0
    %v320 = vadd.f32 0.0, %v319
    %321 = vmatmul.bf16.gmra.mxu0 %v281
    %v322 = vpop.f32.mrf.mxu0
    %v323 = vadd.f32 0.0, %v322
    %v324 = vpop.f32.mrf.mxu0
    %v325 = vadd.f32 0.0, %v324
    %326 = vmatmul.bf16.gmra.mxu0 %v282
    %v327 = vpop.f32.mrf.mxu0
    %v328 = vadd.f32 0.0, %v327
    %v329 = vpop.f32.mrf.mxu0
    %v330 = vadd.f32 0.0, %v329
    %331 = vmatmul.bf16.gmra.mxu0 %v283
    %v332 = vpop.f32.mrf.mxu0
    %v333 = vadd.f32 0.0, %v332
    %v334 = vpop.f32.mrf.mxu0
    %v335 = vadd.f32 0.0, %v334
    %336 = vmatmul.bf16.gmra.mxu0 %v284
    %v337 = vpop.f32.mrf.mxu0
    %v338 = vadd.f32 0.0, %v337
    %v339 = vpop.f32.mrf.mxu0
    %v340 = vadd.f32 0.0, %v339
    %341 = vdwg.mxu0
    %v342 = vadd.f32 %v205, %v303
    %v343 = vadd.f32 %v206, %v305
    %v344 = vadd.f32 %v207, %v308
    %v345 = vadd.f32 %v208, %v310
    %v346 = vadd.f32 %v209, %v313
    %v347 = vadd.f32 %v210, %v315
    %v348 = vadd.f32 %v211, %v318
    %v349 = vadd.f32 %v212, %v320
    %v350 = vadd.f32 %v213, %v323
    %v351 = vadd.f32 %v214, %v325
    %v352 = vadd.f32 %v215, %v328
    %v353 = vadd.f32 %v216, %v330
    %v354 = vadd.f32 %v217, %v333
    %v355 = vadd.f32 %v218, %v335
    %v356 = vadd.f32 %v219, %v338
    %v357 = vadd.f32 %v220, %v340
    %358 = vst [vmem:[#allocation2] sm:$0xff] %v342
    %359 = vst [vmem:[#allocation2 + $0x8] sm:$0xff] %v343
    %360 = vst [vmem:[#allocation2 + $0x10] sm:$0xff] %v344
    %361 = vst [vmem:[#allocation2 + $0x18] sm:$0xff] %v345
    %362 = vst [vmem:[#allocation2 + $0x20] sm:$0xff] %v346
    %363 = vst [vmem:[#allocation2 + $0x28] sm:$0xff] %v347
    %364 = vst [vmem:[#allocation2 + $0x30] sm:$0xff] %v348
    %365 = vst [vmem:[#allocation2 + $0x38] sm:$0xff] %v349
    %366 = vst [vmem:[#allocation2 + $0x40] sm:$0xff] %v350
    %367 = vst [vmem:[#allocation2 + $0x48] sm:$0xff] %v351
    %368 = vst [vmem:[#allocation2 + $0x50] sm:$0xff] %v352
    %369 = vst [vmem:[#allocation2 + $0x58] sm:$0xff] %v353
    %370 = vst [vmem:[#allocation2 + $0x60] sm:$0xff] %v354
    %371 = vst [vmem:[#allocation2 + $0x68] sm:$0xff] %v355
    %372 = vst [vmem:[#allocation2 + $0x70] sm:$0xff] %v356
    %373 = vst [vmem:[#allocation2 + $0x78] sm:$0xff] %v357
    // Predicated region
    $region22: #{tpu_custom_call.1} parent=1 // pred_check
      _
    $region23: #{tpu_custom_call.1} parent=1 // pred_check_branch
      %375 = sbr.rel (0) target = $region25
    $region24: #{tpu_custom_call.1} parent=1 // pred_region
      %377 = vsyncadd [#allocation3], 0
      %s378 = sshll.u32 [#allocation2], 4
      %s379 = int_to_ptr.vmem [resolvable:$true] %s378
      %s380 = sshll.u32 %s4, 4
      %s381 = int_to_ptr.hbm [resolvable:$true] %s380
      %386 = dma.vmem_to_hbm [thread:$0]  %s379, 2048, %s381, [#allocation3], 128, 128, 8
    $region25: #{tpu_custom_call.1} parent=1 // pred_fallthru
      _
    // Predicated region
    $region26: #{tpu_custom_call.1} parent=1 // pred_check
      _
    $region27: #{tpu_custom_call.1} parent=1 // pred_check_branch
      %388 = sbr.rel (0) target = $region29
    $region28: #{tpu_custom_call.1} parent=1 // pred_region
      %390 = dma.done [#allocation3], 2048
    $region29: #{tpu_custom_call.1} parent=1 // pred_fallthru
      _
    %391 = vsyncpa [#allocation3], 1

</llo_original>
